<compile_context>
chip_gen: v7x
topology: tpu7x:2x2x1
jax: 0.10.0
libtpu: 0.0.40
codegen_flags: <defaults>
</compile_context>

<pallas_src>
import functools

import jax
import jax.numpy as jnp
from jax import lax
from jax.experimental import pallas as pl
from jax.experimental.pallas import tpu as pltpu

_GN_EPS = 1e-5  # PyTorch GroupNorm default eps


def _round_up(v, m):
    return (v + m - 1) // m * m


def _make_kernel(C, L, use_bf16_mxu):
    """Build the BasicBlock kernel for real sizes (C, L); refs may be padded."""

    def kernel(x_ref, w1_ref, w2_ref, o_ref):
        TB, Cp, Lp = x_ref.shape

        # Weights stay VMEM-resident across the grid (constant index_map).
        w1 = w1_ref[...]
        w2 = w2_ref[...]

        inv_n = 1.0 / (C * L)  # real element count, not padded

        # Hoisted masks (built once per grid step).
        lane = lax.broadcasted_iota(jnp.int32, (Cp, Lp), 1)
        is_first = lane == 0            # conv zero-pad on the left
        is_last = lane == (L - 1)       # conv zero-pad on the right (real L)

        has_pad = (Cp != C) or (Lp != L)
        lane_pad = Lp != L
        if has_pad:
            chan = lax.broadcasted_iota(jnp.int32, (Cp, Lp), 0)
            valid = (chan < C) & (lane < L)
        if lane_pad:
            pad_lane = lane >= L

        def conv3(a, wf):
            # a: (Cp, Lp) f32. One fused MXU matmul per 3-tap conv:
            # stacked (3Cp, Lp) = [a[l-1]; a; a[l+1]] against folded (Cp, 3Cp).
            # Shifts via XLU roll, boundaries zeroed with one select each.
            a_lm1 = jnp.where(is_first, 0.0, pltpu.roll(a, 1, 1))
            a_lp1 = jnp.where(is_last, 0.0, pltpu.roll(a, Lp - 1, 1))  # == shift -1
            stacked = jnp.concatenate([a_lm1, a, a_lp1], axis=0)       # (3Cp, Lp)
            if use_bf16_mxu:
                stacked = stacked.astype(jnp.bfloat16)
            h = jnp.dot(wf, stacked, preferred_element_type=jnp.float32)
            if lane_pad:
                # Padded lanes would otherwise pick up a[L-1] via the left tap.
                h = jnp.where(pad_lane, 0.0, h)
            return h

        def gn_relu(a):
            # GroupNorm(num_groups=1, affine=False) over real (C, L), two-pass.
            mean = jnp.sum(a) * inv_n
            d = a - mean
            if has_pad:
                d = jnp.where(valid, d, 0.0)   # keep stats exact, re-zero padding
            var = jnp.sum(d * d) * inv_n
            return jnp.maximum(d * lax.rsqrt(var + _GN_EPS), 0.0)

        def sample(i):
            x = x_ref[i].astype(jnp.float32)   # (Cp, Lp), f32 for GN / residual
            h = gn_relu(conv3(x, w1))
            h = gn_relu(conv3(h, w2))
            # downsample is None, stride=1 -> identity = x
            o_ref[i] = jnp.maximum(h + x, 0.0).astype(o_ref.dtype)

        if TB == 1:
            sample(0)
        else:
            def body(i, carry):
                sample(i)
                return carry
            lax.fori_loop(0, TB, body, 0)   # rolled: no vreg / i-cache blow-up

    return kernel


def _fold_weight(w, cp, dtype):
    """(Cout, Cin, 3) PyTorch OIW -> zero-padded (cp, 3*cp), columns [tap0|tap1|tap2]."""
    co, ci, k = w.shape
    if cp != co or cp != ci:
        w = jnp.pad(w, ((0, cp - co), (0, cp - ci), (0, 0)))
    return jnp.transpose(w, (0, 2, 1)).reshape(cp, k * cp).astype(dtype)


def _pick_tb(B, cp, lp, itemsize, tb):
    if tb is None:
        tb = max(1, B // 8)  # >= ~8 grid steps -> real pipelining, both v7x cores busy
        per_sample = cp * lp * itemsize
        tb = min(tb, max(1, (2 * 1024 * 1024) // per_sample))  # <= ~2 MiB / block
    tb = max(1, min(int(tb), B))
    while B % tb:            # exact cover; handles odd batch sizes
        tb -= 1
    return tb


@functools.partial(jax.jit, static_argnames=("tb", "use_bf16_mxu"))
def basic_block(x, w1, w2, tb=None, use_bf16_mxu=True):
    """x: (B, C, L); w1, w2: (C, C, 3) f32 (PyTorch OIW layout)."""
    B, C, L = x.shape
    cp = _round_up(C, 8)     # f32 sublane granularity
    lp = _round_up(L, 128)   # lane granularity -> unmasked lane-dense stores

    w_dtype = jnp.bfloat16 if use_bf16_mxu else jnp.float32
    w1f = _fold_weight(w1, cp, w_dtype)   # (cp, 3cp)
    w2f = _fold_weight(w2, cp, w_dtype)

    if cp != C or lp != L:
        xp = jnp.pad(x, ((0, 0), (0, cp - C), (0, lp - L)))
    else:
        xp = x

    tb = _pick_tb(B, cp, lp, xp.dtype.itemsize, tb)
    grid_b = B // tb

    cost = pl.CostEstimate(
        flops=2 * B * 2 * cp * (3 * cp) * lp,       # two fused convs per sample
        transcendentals=2 * B,                      # two rsqrt per sample
        bytes_accessed=2 * B * cp * lp * xp.dtype.itemsize
        + 2 * cp * 3 * cp * w1f.dtype.itemsize,
    )

    out = pl.pallas_call(
        _make_kernel(C, L, use_bf16_mxu),
        out_shape=jax.ShapeDtypeStruct((B, cp, lp), x.dtype),
        grid_spec=pltpu.PrefetchScalarGridSpec(
            num_scalar_prefetch=0,
            grid=(grid_b,),
            in_specs=[
                pl.BlockSpec((tb, cp, lp), lambda b: (b, 0, 0)),
                pl.BlockSpec((cp, 3 * cp), lambda b: (0, 0)),
                pl.BlockSpec((cp, 3 * cp), lambda b: (0, 0)),
            ],
            out_specs=pl.BlockSpec((tb, cp, lp), lambda b: (b, 0, 0)),
        ),
        compiler_params=pltpu.CompilerParams(
            dimension_semantics=("parallel",),
            vmem_limit_bytes=32 * 1024 * 1024,  # blocks budgeted to ~2 MiB: safe on v5e/v6e/v7x
        ),
        cost_estimate=cost,
    )(xp, w1f, w2f)

    if cp != C or lp != L:
        out = out[:, :C, :L]
    return out


def _reference(x, w1, w2):
    """Pure-JAX reference mirroring the PyTorch forward."""
    dn = lax.conv_dimension_numbers(x.shape, w1.shape, ("NCH", "OIH", "NCH"))

    def conv(a, w):
        return lax.conv_general_dilated(a, w, window_strides=(1,),
                                        padding=[(1, 1)], dimension_numbers=dn)

    def gn(a):
        mean = jnp.mean(a, axis=(1, 2), keepdims=True)
        var = jnp.mean((a - mean) ** 2, axis=(1, 2), keepdims=True)
        return (a - mean) * lax.rsqrt(var + _GN_EPS)

    out = jax.nn.relu(gn(conv(x, w1)))
    out = jax.nn.relu(gn(conv(out, w2)))
    return jax.nn.relu(out + x)


if __name__ == "__main__":
    key = jax.random.PRNGKey(0)
    kx, k1, k2, kx2, k3, k4 = jax.random.split(key, 6)

    # Aligned case (stride=1, downsample=None, groups=1 -> inplanes == planes).
    B, C, L = 8, 8, 128
    x = jax.random.normal(kx, (B, C, L), dtype=jnp.float32)
    fan_in = 3 * C
    w1 = jax.random.uniform(k1, (C, C, 3), jnp.float32, -1.0, 1.0) / jnp.sqrt(fan_in)
    w2 = jax.random.uniform(k2, (C, C, 3), jnp.float32, -1.0, 1.0) / jnp.sqrt(fan_in)

    ref = jax.block_until_ready(_reference(x, w1, w2))

    # f32-MXU path (tight check of conv folding / GN / residual); default tb=1 -> 8 grid steps.
    out = jax.block_until_ready(basic_block(x, w1, w2, use_bf16_mxu=False))
    assert out.shape == (B, C, L)
    assert jnp.allclose(out, ref, atol=1e-3, rtol=1e-3), "f32 path mismatch vs reference"

    # Default bf16-MXU path with tb=2 (grid=4): exercises the rolled batch-tile loop.
    out_bf = jax.block_until_ready(basic_block(x, w1, w2, tb=2))
    assert jnp.allclose(out_bf, ref, atol=6e-2, rtol=6e-2), "bf16 path mismatch vs reference"

    # Unaligned case: odd batch + C/L padding masks (C->8, L->128 inside the wrapper).
    B2, C2, L2 = 3, 6, 100
    x2 = jax.random.normal(kx2, (B2, C2, L2), dtype=jnp.float32)
    fi2 = 3 * C2
    w1b = jax.random.uniform(k3, (C2, C2, 3), jnp.float32, -1.0, 1.0) / jnp.sqrt(fi2)
    w2b = jax.random.uniform(k4, (C2, C2, 3), jnp.float32, -1.0, 1.0) / jnp.sqrt(fi2)
    ref2 = jax.block_until_ready(_reference(x2, w1b, w2b))
    out2 = jax.block_until_ready(basic_block(x2, w1b, w2b, use_bf16_mxu=False))
    assert out2.shape == (B2, C2, L2)
    assert jnp.allclose(out2, ref2, atol=1e-3, rtol=1e-3), "padded path mismatch vs reference"

    print("KERNEL_OK")
</pallas_src>

<mosaic_0001>
module attributes {stable_mosaic.version = 11 : i64} {
  func.func @kernel(%arg0: i32, %arg1: memref<1x8x128xf32, #tpu.memory_space<vmem>>, %arg2: memref<8x24xf32, #tpu.memory_space<vmem>>, %arg3: memref<8x24xf32, #tpu.memory_space<vmem>>, %arg4: memref<1x8x128xf32, #tpu.memory_space<vmem>>) attributes {dimension_semantics = [#tpu.dimension_semantics<parallel>], iteration_bounds = array<i64: 8>, scalar_prefetch = 0 : i64, scratch_operands = 0 : i64, tpu.core_type = #tpu.core_type<tc>, window_params = [{transform_indices = @transform_0, window_bounds = array<i64: 1, 8, 128>}, {pipeline_mode = #tpu.pipeline_mode<synchronous>, transform_indices = @transform_1, window_bounds = array<i64: 8, 24>}, {pipeline_mode = #tpu.pipeline_mode<synchronous>, transform_indices = @transform_2, window_bounds = array<i64: 8, 24>}, {transform_indices = @transform_3, window_bounds = array<i64: 1, 8, 128>}]} {
    %c0 = arith.constant 0 : index
    %c0_0 = arith.constant 0 : index
    %0 = vector.load %arg2[%c0, %c0_0] : memref<8x24xf32, #tpu.memory_space<vmem>>, vector<8x24xf32>
    %c0_1 = arith.constant 0 : index
    %c0_2 = arith.constant 0 : index
    %1 = vector.load %arg3[%c0_1, %c0_2] : memref<8x24xf32, #tpu.memory_space<vmem>>, vector<8x24xf32>
    %2 = tpu.iota {dimensions = array<i32: 1>} : vector<8x128xi32>
    %c0_i32 = arith.constant 0 : i32
    %3 = vector.broadcast %c0_i32 : i32 to vector<8x128xi32>
    %4 = arith.cmpi eq, %2, %3 : vector<8x128xi32>
    %c127_i32 = arith.constant 127 : i32
    %5 = vector.broadcast %c127_i32 : i32 to vector<8x128xi32>
    %6 = arith.cmpi eq, %2, %5 : vector<8x128xi32>
    %c0_3 = arith.constant 0 : index
    %c0_4 = arith.constant 0 : index
    %c0_5 = arith.constant 0 : index
    %7 = vector.load %arg1[%c0_3, %c0_4, %c0_5] : memref<1x8x128xf32, #tpu.memory_space<vmem>>, vector<1x8x128xf32>
    %8 = vector.shape_cast %7 : vector<1x8x128xf32> to vector<8x128xf32>
    %c1_i32 = arith.constant 1 : i32
    %9 = tpu.dynamic_rotate %8 by %c1_i32 dim 1 : vector<8x128xf32>, i32 -> vector<8x128xf32>
    %cst = arith.constant 0.000000e+00 : f32
    %10 = vector.broadcast %cst : f32 to vector<8x128xf32>
    %11 = arith.select %4, %10, %9 : vector<8x128xi1>, vector<8x128xf32>
    %c127_i32_6 = arith.constant 127 : i32
    %12 = tpu.dynamic_rotate %8 by %c127_i32_6 dim 1 : vector<8x128xf32>, i32 -> vector<8x128xf32>
    %cst_7 = arith.constant 0.000000e+00 : f32
    %13 = vector.broadcast %cst_7 : f32 to vector<8x128xf32>
    %14 = arith.select %6, %13, %12 : vector<8x128xi1>, vector<8x128xf32>
    %15 = tpu.concatenate %11, %8, %14 in 0 : vector<8x128xf32>, vector<8x128xf32>, vector<8x128xf32> -> vector<24x128xf32>
    %cst_8 = arith.constant dense<0.000000e+00> : vector<8x128xf32>
    %16 = tpu.matmul %0, %15, %cst_8 {dimension_numbers = #tpu.dot_dimension_numbers<[1], [0], [0], [1], [0, 0, 1, 1], [], []>} : vector<8x24xf32>, vector<24x128xf32>, vector<8x128xf32> -> vector<8x128xf32>
    %17 = vector.shape_cast %16 : vector<8x128xf32> to vector<1x8x128xf32>
    %cst_9 = arith.constant dense<0.000000e+00> : vector<1xf32>
    %18 = vector.multi_reduction <add>, %17, %cst_9 [1, 2] : vector<1x8x128xf32> to vector<1xf32>
    %19 = vector.shape_cast %18 : vector<1xf32> to vector<1x1x1xf32>
    %20 = vector.extract %19[0, 0, 0] : f32 from vector<1x1x1xf32>
    %cst_10 = arith.constant 9.765625E-4 : f32
    %21 = arith.mulf %20, %cst_10 : f32
    %22 = vector.broadcast %21 : f32 to vector<8x128xf32>
    %23 = arith.subf %16, %22 : vector<8x128xf32>
    %24 = arith.mulf %23, %23 : vector<8x128xf32>
    %25 = vector.shape_cast %24 : vector<8x128xf32> to vector<1x8x128xf32>
    %cst_11 = arith.constant dense<0.000000e+00> : vector<1xf32>
    %26 = vector.multi_reduction <add>, %25, %cst_11 [1, 2] : vector<1x8x128xf32> to vector<1xf32>
    %27 = vector.shape_cast %26 : vector<1xf32> to vector<1x1x1xf32>
    %28 = vector.extract %27[0, 0, 0] : f32 from vector<1x1x1xf32>
    %cst_12 = arith.constant 9.765625E-4 : f32
    %29 = arith.mulf %28, %cst_12 : f32
    %cst_13 = arith.constant 9.99999974E-6 : f32
    %30 = arith.addf %29, %cst_13 : f32
    %31 = math.rsqrt %30 : f32
    %32 = vector.broadcast %31 : f32 to vector<8x128xf32>
    %33 = arith.mulf %23, %32 : vector<8x128xf32>
    %cst_14 = arith.constant 0.000000e+00 : f32
    %34 = vector.broadcast %cst_14 : f32 to vector<8x128xf32>
    %35 = arith.maximumf %33, %34 : vector<8x128xf32>
    %c1_i32_15 = arith.constant 1 : i32
    %36 = tpu.dynamic_rotate %35 by %c1_i32_15 dim 1 : vector<8x128xf32>, i32 -> vector<8x128xf32>
    %cst_16 = arith.constant 0.000000e+00 : f32
    %37 = vector.broadcast %cst_16 : f32 to vector<8x128xf32>
    %38 = arith.select %4, %37, %36 : vector<8x128xi1>, vector<8x128xf32>
    %c127_i32_17 = arith.constant 127 : i32
    %39 = tpu.dynamic_rotate %35 by %c127_i32_17 dim 1 : vector<8x128xf32>, i32 -> vector<8x128xf32>
    %cst_18 = arith.constant 0.000000e+00 : f32
    %40 = vector.broadcast %cst_18 : f32 to vector<8x128xf32>
    %41 = arith.select %6, %40, %39 : vector<8x128xi1>, vector<8x128xf32>
    %42 = tpu.concatenate %38, %35, %41 in 0 : vector<8x128xf32>, vector<8x128xf32>, vector<8x128xf32> -> vector<24x128xf32>
    %cst_19 = arith.constant dense<0.000000e+00> : vector<8x128xf32>
    %43 = tpu.matmul %1, %42, %cst_19 {dimension_numbers = #tpu.dot_dimension_numbers<[1], [0], [0], [1], [0, 0, 1, 1], [], []>} : vector<8x24xf32>, vector<24x128xf32>, vector<8x128xf32> -> vector<8x128xf32>
    %44 = vector.shape_cast %43 : vector<8x128xf32> to vector<1x8x128xf32>
    %cst_20 = arith.constant dense<0.000000e+00> : vector<1xf32>
    %45 = vector.multi_reduction <add>, %44, %cst_20 [1, 2] : vector<1x8x128xf32> to vector<1xf32>
    %46 = vector.shape_cast %45 : vector<1xf32> to vector<1x1x1xf32>
    %47 = vector.extract %46[0, 0, 0] : f32 from vector<1x1x1xf32>
    %cst_21 = arith.constant 9.765625E-4 : f32
    %48 = arith.mulf %47, %cst_21 : f32
    %49 = vector.broadcast %48 : f32 to vector<8x128xf32>
    %50 = arith.subf %43, %49 : vector<8x128xf32>
    %51 = arith.mulf %50, %50 : vector<8x128xf32>
    %52 = vector.shape_cast %51 : vector<8x128xf32> to vector<1x8x128xf32>
    %cst_22 = arith.constant dense<0.000000e+00> : vector<1xf32>
    %53 = vector.multi_reduction <add>, %52, %cst_22 [1, 2] : vector<1x8x128xf32> to vector<1xf32>
    %54 = vector.shape_cast %53 : vector<1xf32> to vector<1x1x1xf32>
    %55 = vector.extract %54[0, 0, 0] : f32 from vector<1x1x1xf32>
    %cst_23 = arith.constant 9.765625E-4 : f32
    %56 = arith.mulf %55, %cst_23 : f32
    %cst_24 = arith.constant 9.99999974E-6 : f32
    %57 = arith.addf %56, %cst_24 : f32
    %58 = math.rsqrt %57 : f32
    %59 = vector.broadcast %58 : f32 to vector<8x128xf32>
    %60 = arith.mulf %50, %59 : vector<8x128xf32>
    %cst_25 = arith.constant 0.000000e+00 : f32
    %61 = vector.broadcast %cst_25 : f32 to vector<8x128xf32>
    %62 = arith.maximumf %60, %61 : vector<8x128xf32>
    %63 = arith.addf %62, %8 : vector<8x128xf32>
    %cst_26 = arith.constant 0.000000e+00 : f32
    %64 = vector.broadcast %cst_26 : f32 to vector<8x128xf32>
    %65 = arith.maximumf %63, %64 : vector<8x128xf32>
    %c0_27 = arith.constant 0 : index
    %c0_28 = arith.constant 0 : index
    %c0_29 = arith.constant 0 : index
    %66 = vector.load %arg4[%c0_27, %c0_28, %c0_29] : memref<1x8x128xf32, #tpu.memory_space<vmem>>, vector<1x8x128xf32>
    %67 = vector.shape_cast %66 : vector<1x8x128xf32> to vector<8x128xf32>
    %68 = vector.shape_cast %65 : vector<8x128xf32> to vector<1x8x128xf32>
    tpu.vector_store %arg4[%c0_27, %c0_28, %c0_29], %68 {strides = array<i32>} : memref<1x8x128xf32, #tpu.memory_space<vmem>>, vector<1x8x128xf32>,
    return
  }
  func.func @transform_0(%arg0: i32) -> (i32, i32, i32) {
    %c0_i32 = arith.constant 0 : i32
    %c0_i32_0 = arith.constant 0 : i32
    %c0_i32_1 = arith.constant 0 : i32
    return %arg0, %c0_i32, %c0_i32_0 : i32, i32, i32
  }
  func.func @transform_1(%arg0: i32) -> (i32, i32) {
    %c0_i32 = arith.constant 0 : i32
    %c0_i32_0 = arith.constant 0 : i32
    %c0_i32_1 = arith.constant 0 : i32
    return %c0_i32, %c0_i32_0 : i32, i32
  }
  func.func @transform_2(%arg0: i32) -> (i32, i32) {
    %c0_i32 = arith.constant 0 : i32
    %c0_i32_0 = arith.constant 0 : i32
    %c0_i32_1 = arith.constant 0 : i32
    return %c0_i32, %c0_i32_0 : i32, i32
  }
  func.func @transform_3(%arg0: i32) -> (i32, i32, i32) {
    %c0_i32 = arith.constant 0 : i32
    %c0_i32_0 = arith.constant 0 : i32
    %c0_i32_1 = arith.constant 0 : i32
    return %arg0, %c0_i32, %c0_i32_0 : i32, i32, i32
  }
}

</mosaic_0001>

<llo_original>
// kernel: basic_block.1
$region0: #{basic_block.1}
  #allocation0 [shape = 'u32[]', space=smem, size = 0x4, offset = 0x4, fixed_abs, tag = 'smem constant byte address 0x4 - core index']
  #allocation1 [shape = 'u32[144,128]{1,0:T(1,128)}', space=vmem, size = 0x12000, scoped, tag = 'internal scratch']
  %s0 = inlined_call_operand.vmem [shape: f32[8,8,128], index: 0, kind: input, shape index: {}]
  %s1 = inlined_call_operand.vmem [shape: f32[8,24], index: 1, kind: input, shape index: {}]
  %s2 = inlined_call_operand.vmem [shape: f32[8,24], index: 2, kind: input, shape index: {}]
  %s3 = inlined_call_operand.hbm [shape: f32[8,8,128], index: 3, kind: output, shape index: {}]
  %s4 = sld [smem:[#allocation0]]
  $region45: #{basic_block.1} parent=0
    _
  %s6 = ssub.s32 1, %s4
  %s7 = scalar_select 0, %s6, %s4
  $region1: #{basic_block.1} parent=0
    #allocation2 [shape = 'u8[8192]{0}', space=vmem, size = 0x2000, scoped, tag = 'output window, operand 0']
    #allocation3 [shape = 's32[2]{0}', space=sflag, size = 0x8, scoped, tag = 'scoped memory for basic_block.1']
    %8 = vsyncpa [#allocation3], 0
    %s9 = scalar_lea.sflag [#allocation3], 1
    %10 = vsyncpa %s9, 0
    loop: start=0, step=1, limit=10
    $region2: #{basic_block.1} parent=1 // loop_pre_header
      _
    $region3: #{basic_block.1} parent=1 // loop_header
      %s12 = sphi 0, %s16
      %p13 = scmp.ge.s32.totalorder %s12, 10
      %s22 = sphi 0, %s24
      %s25 = sphi 0, %s22
      %s26 = sphi 0, %s25
      %s42 = sphi 0, %s26
      %s46 = sphi 0, %s46
      %s48 = sphi 0, %s46
      %s49 = sphi 0, %s48
      %s63 = sphi 0, %s49
      %s67 = sphi 0, %s67
      %s69 = sphi 0, %s67
      %s70 = sphi 0, %s69
      %s84 = sphi 0, %s70
      %s90 = sphi 0, %s92
      %s93 = sphi 0, %s90
      %s94 = sphi 0, %s93
      %s110 = sphi 0, %s94
    $region4: #{basic_block.1} parent=1 // loop_header_branch
      %15 = sbr.rel (%p13) target = $region8
    $region5: #{basic_block.1} parent=1 // loop_body
      %s17 = ssub.s32 %s12, 1
      %s18 = ssub.s32 %s12, 2
      %s19 = sadd.s32 %s12, 1
      %s20 = ssub.s32 %s12, %s19
      %p21 = scmp.eq.s32.totalorder %s20, 0
      %s23 = sadd.s32 %s22, 1
      %s24 = scalar_select %p21, %s22, %s23
      %p27 = pneg %p21
      %p28 = scmp.eq.s32.totalorder %s12, 7
      %p29 = por %p27, %p28
      %p30 = scmp.ne.s32.totalorder %s22, %s25
      %p31 = scmp.eq.s32.totalorder %s12, 0
      %p32 = por %p30, %p31
      %p33 = scmp.ne.s32.totalorder %s22, %s25
      %p34 = scmp.eq.s32.totalorder %s17, 7
      %p35 = por %p33, %p34
      %p36 = scmp.ne.s32.totalorder %s25, %s26
      %p37 = scmp.eq.s32.totalorder %s17, 0
      %p38 = por %p36, %p37
      %p39 = scmp.ne.s32.totalorder %s25, %s26
      %p40 = scmp.eq.s32.totalorder %s18, 7
      %p41 = por %p39, %p40
      %p43 = scmp.ne.s32.totalorder %s26, %s42
      %p44 = scmp.eq.s32.totalorder %s18, 0
      %p45 = por %p43, %p44
      %s47 = sadd.s32 %s46, 1
      %p50 = scmp.eq.s32.totalorder %s12, 7
      %p51 = scmp.ne.s32.totalorder %s46, %s48
      %p52 = scmp.eq.s32.totalorder %s12, 0
      %p53 = por %p51, %p52
      %p54 = scmp.ne.s32.totalorder %s46, %s48
      %p55 = scmp.eq.s32.totalorder %s17, 7
      %p56 = por %p54, %p55
      %p57 = scmp.ne.s32.totalorder %s48, %s49
      %p58 = scmp.eq.s32.totalorder %s17, 0
      %p59 = por %p57, %p58
      %p60 = scmp.ne.s32.totalorder %s48, %s49
      %p61 = scmp.eq.s32.totalorder %s18, 7
      %p62 = por %p60, %p61
      %p64 = scmp.ne.s32.totalorder %s49, %s63
      %p65 = scmp.eq.s32.totalorder %s18, 0
      %p66 = por %p64, %p65
      %s68 = sadd.s32 %s67, 1
      %p71 = scmp.eq.s32.totalorder %s12, 7
      %p72 = scmp.ne.s32.totalorder %s67, %s69
      %p73 = scmp.eq.s32.totalorder %s12, 0
      %p74 = por %p72, %p73
      %p75 = scmp.ne.s32.totalorder %s67, %s69
      %p76 = scmp.eq.s32.totalorder %s17, 7
      %p77 = por %p75, %p76
      %p78 = scmp.ne.s32.totalorder %s69, %s70
      %p79 = scmp.eq.s32.totalorder %s17, 0
      %p80 = por %p78, %p79
      %p81 = scmp.ne.s32.totalorder %s69, %s70
      %p82 = scmp.eq.s32.totalorder %s18, 7
      %p83 = por %p81, %p82
      %p85 = scmp.ne.s32.totalorder %s70, %s84
      %p86 = scmp.eq.s32.totalorder %s18, 0
      %p87 = por %p85, %p86
      %s88 = ssub.s32 %s12, %s19
      %p89 = scmp.eq.s32.totalorder %s88, 0
      %s91 = sadd.s32 %s90, 1
      %s92 = scalar_select %p89, %s90, %s91
      %p95 = pneg %p89
      %p96 = scmp.eq.s32.totalorder %s12, 7
      %p97 = por %p95, %p96
      %p98 = scmp.ne.s32.totalorder %s90, %s93
      %p99 = scmp.eq.s32.totalorder %s12, 0
      %p100 = por %p98, %p99
      %p101 = scmp.ne.s32.totalorder %s90, %s93
      %p102 = scmp.eq.s32.totalorder %s17, 7
      %p103 = por %p101, %p102
      %p104 = scmp.ne.s32.totalorder %s93, %s94
      %p105 = scmp.eq.s32.totalorder %s17, 0
      %p106 = por %p104, %p105
      %p107 = scmp.ne.s32.totalorder %s93, %s94
      %p108 = scmp.eq.s32.totalorder %s18, 7
      %p109 = por %p107, %p108
      %p111 = scmp.ne.s32.totalorder %s94, %s110
      %p112 = scmp.eq.s32.totalorder %s18, 0
      %p113 = por %p111, %p112
      %p114 = scmp.le.s32.totalorder 1, %s12
      %p115 = scmp.lt.s32.totalorder %s12, 9
      %p116 = pnand %p114, %p115
      %p117 = pneg %p116
      // Predicated region
      $region9: #{basic_block.1} parent=5 // pred_check
        _
      $region10: #{basic_block.1} parent=5 // pred_check_branch
        %119 = sbr.rel (%p116) target = $region12
      $region11: #{basic_block.1} parent=5 // pred_region
        %s120 = ssub.s32 %s12, 1
        // Predicated region
        $region13: #{basic_block.1} parent=11 // pred_check
          %p121 = pneg %p59
        $region14: #{basic_block.1} parent=11 // pred_check_branch
          %123 = sbr.rel (%p121) target = $region16
        $region15: #{basic_block.1} parent=11 // pred_region
          _
        $region16: #{basic_block.1} parent=11 // pred_fallthru
          _
        // Predicated region
        $region17: #{basic_block.1} parent=11 // pred_check
          %p124 = pneg %p80
        $region18: #{basic_block.1} parent=11 // pred_check_branch
          %126 = sbr.rel (%p124) target = $region20
        $region19: #{basic_block.1} parent=11 // pred_region
          _
        $region20: #{basic_block.1} parent=11 // pred_fallthru
          _
      $region12: #{basic_block.1} parent=5 // pred_fallthru
        _
      %p127 = scmp.lt.s32.totalorder %s12, 8
      // Predicated region
      $region21: #{basic_block.1} parent=5 // pred_check
        %p128 = pneg %p127
      $region22: #{basic_block.1} parent=5 // pred_check_branch
        %130 = sbr.rel (%p128) target = $region24
      $region23: #{basic_block.1} parent=5 // pred_region
        // Predicated region
        $region25: #{basic_block.1} parent=23 // pred_check
          %p131 = pneg %p32
        $region26: #{basic_block.1} parent=23 // pred_check_branch
          %133 = sbr.rel (%p131) target = $region28
        $region27: #{basic_block.1} parent=23 // pred_region
          %p134 = scmp.lt.s32.totalorder %s12, 7
          %s135 = scalar_select %p134, %s12, 7
          %s136 = smul.addr %s135, 8
          %s137 = scalar_lea.vmem %s0, %s136
        $region28: #{basic_block.1} parent=23 // pred_fallthru
          _
      $region24: #{basic_block.1} parent=5 // pred_fallthru
        _
      %p138 = scmp.le.s32.totalorder 1, %s12
      %p139 = scmp.lt.s32.totalorder %s12, 9
      %p140 = pnand %p138, %p139
      %p141 = pneg %p140
      // Predicated region
      $region29: #{basic_block.1} parent=5 // pred_check
        _
      $region30: #{basic_block.1} parent=5 // pred_check_branch
        %143 = sbr.rel (%p140) target = $region32
      $region31: #{basic_block.1} parent=5 // pred_region
        %s144 = ssub.s32 %s12, 1
        %p145 = scmp.lt.s32.totalorder %s17, 7
        %s146 = scalar_select %p145, %s17, 7
        %s147 = smul.addr %s146, 8
        %s148 = scalar_lea.vmem %s0, %s147
        %p149 = pneg %p38
        %p150 = pneg %p35
        %p151 = pneg %p59
        %p152 = pneg %p56
        %p153 = pneg %p80
        %p154 = pneg %p77
        %p155 = pneg %p106
        %p156 = pneg %p103
        %s157 = sand.u32 %s93, 1
        %s158 = scalar_lea.sflag [#allocation3], %s157
        %s159 = sand.u32 %s93, 1
        %s160 = smul.addr %s159, 8
        %s161 = scalar_lea.vmem [#allocation2], %s160
        %p162 = scmp.lt.s32.totalorder %s17, 7
        %s163 = scalar_select %p162, %s17, 7
        %s164 = smul.addr %s163, 8
        %s165 = scalar_lea.vmem %s0, %s164
        %v166 = vld [vmem:[%s1] sm:$0xff]
        %v167 = vld [vmem:[%s2] sm:$0xff]
        %v168 = vlaneseq
        %v169 = vand.u32 %v168, 127
        %vm170 = vcmp.eq.s32.totalorder %v169, 0
        %vm171 = vcmp.eq.s32.totalorder %v169, 127
        %v172 = vld [vmem:[%s165] sm:$0xff]
        %173 = vrot.lane.b32.xlu0 %v172, 1
        %v174 = vpop.permute.xlu0 %173
        %v175 = vsel %vm170, 0.0, %v174
        %176 = vrot.lane.b32.xlu0 %v172, 127
        %v177 = vpop.permute.xlu0 %176
        %v178 = vsel %vm171, 0.0, %v177
        %vm179 = vcmask 195584
        %v181 = vsel %vm179, %v166, 0
        %183 = vmatprep.subr.mxu0 0.0
        %184 = vmatpush1.msra.mxu0 %v175
        %185 = vmatprep.subr.mxu0 0.0
        %186 = vmatpush1.msra.mxu0 %v172
        %187 = vmatprep.subr.mxu0 0.0
        %188 = vmatpush1.msra.mxu0 %v178
        %189 = vmatprep.subr.mxu0 0.0
        %190 = vmatpush1.msra.mxu0 0.0
        %191 = vmatprep.subr.mxu0 0.0
        %192 = vmatpush1.msra.mxu0 0.0
        %193 = vmatprep.subr.mxu0 0.0
        %194 = vmatpush1.msra.mxu0 0.0
        %195 = vmatprep.subr.mxu0 0.0
        %196 = vmatpush1.msra.mxu0 0.0
        %197 = vmatprep.subr.mxu0 0.0
        %198 = vmatpush1.msra.mxu0 0.0
        %199 = vmatprep.subr.mxu0 0.0
        %200 = vmatpush1.msra.mxu0 0.0
        %201 = vmatprep.subr.mxu0 0.0
        %202 = vmatpush1.msra.mxu0 0.0
        %203 = vmatprep.subr.mxu0 0.0
        %204 = vmatpush1.msra.mxu0 0.0
        %205 = vmatprep.subr.mxu0 0.0
        %206 = vmatpush1.msra.mxu0 0.0
        %207 = vmatprep.subr.mxu0 0.0
        %208 = vmatpush1.msra.mxu0 0.0
        %209 = vmatprep.subr.mxu0 0.0
        %210 = vmatpush1.msra.mxu0 0.0
        %211 = vmatprep.subr.mxu0 0.0
        %212 = vmatpush1.msra.mxu0 0.0
        %213 = vmatprep.subr.mxu0 0.0
        %214 = vmatpush1.msra.mxu0 0.0
        %215 = vmatprep.subr.mxu0 0.0
        %216 = vmatpush1.msra.mxu0 0.0
        %217 = vmatprep.subr.mxu0 0.0
        %218 = vmatpush1.msra.mxu0 0.0
        %219 = vmatprep.subr.mxu0 0.0
        %220 = vmatpush1.msra.mxu0 0.0
        %221 = vmatprep.subr.mxu0 0.0
        %222 = vmatpush1.msra.mxu0 0.0
        %223 = vmatprep.subr.mxu0 0.0
        %224 = vmatpush1.msra.mxu0 0.0
        %225 = vmatprep.subr.mxu0 0.0
        %226 = vmatpush1.msra.mxu0 0.0
        %227 = vmatprep.subr.mxu0 0.0
        %228 = vmatpush1.msra.mxu0 0.0
        %229 = vmatprep.subr.mxu0 0.0
        %230 = vmatpush1.msra.mxu0 0.0
        %231 = vmatprep.subr.mxu0 0.0
        %232 = vmatpush1.msra.mxu0 0.0
        %233 = vmatprep.subr.mxu0 0.0
        %234 = vmatpush1.msra.mxu0 0.0
        %235 = vmatprep.subr.mxu0 0.0
        %236 = vmatpush1.msra.mxu0 0.0
        %237 = vmatprep.subr.mxu0 0.0
        %238 = vmatpush1.msra.mxu0 0.0
        %239 = vmatprep.subr.mxu0 0.0
        %240 = vmatpush1.msra.mxu0 0.0
        %241 = vmatprep.subr.mxu0 0.0
        %242 = vmatpush1.msra.mxu0 0.0
        %243 = vmatprep.subr.mxu0 0.0
        %244 = vmatpush1.msra.mxu0 0.0
        %245 = vmatprep.subr.mxu0 0.0
        %246 = vmatpush1.msra.mxu0 0.0
        %247 = vmatprep.mubr.f32.mxu0 0.0
        %248 = vmatmul.mubr.f32.gmra.mrb[0].mxu0 %v181
        %v249 = vpop.f32.mrb[0].mxu0
        %v250 = vadd.f32 0.0, %v249
        %v251 = vpop.f32.mrb[0].mxu0
        %252 = vdwg.mxu0
        %253 = vadd.xlane.f32.xlu0 %v250
        %v254 = vpop.xlane.xlu0 %253
        %v255 = vrot.slane %v254, 4
        %v256 = vadd.f32 %v254, %v255
        %v257 = vrot.slane %v256, 2
        %v258 = vadd.f32 %v256, %v257
        %v259 = vrot.slane %v258, 1
        %v260 = vadd.f32 %v258, %v259
        %s261 = vtos %v260
        %s262 = smul.f32 %s261, 0.0009765625
        %v263 = vstv %s262
        %v264 = vsub.f32 %v250, %v263
        %v265 = vmul.f32 %v264, %v264
        %266 = vadd.xlane.f32.xlu0 %v265
        %v267 = vpop.xlane.xlu0 %266
        %v268 = vrot.slane %v267, 4
        %v269 = vadd.f32 %v267, %v268
        %v270 = vrot.slane %v269, 2
        %v271 = vadd.f32 %v269, %v270
        %v272 = vrot.slane %v271, 1
        %v273 = vadd.f32 %v271, %v272
        %s274 = vtos %v273
        %s275 = smul.f32 %s274, 0.0009765625
        %s276 = sadd.f32 %s275, 1e-05
        %v277 = vstv %s276
        %v278 = vrsqrt.pop %v277
        %s279 = vtos %v278
        %v280 = vstv %s279
        %v281 = vmul.f32 %v264, %v280
        %v282 = vmax.f32 %v281, 0.0
        %283 = vrot.lane.b32.xlu0 %v282, 1
        %v284 = vpop.permute.xlu0 %283
        %v285 = vsel %vm170, 0.0, %v284
        %286 = vrot.lane.b32.xlu0 %v282, 127
        %v287 = vpop.permute.xlu0 %286
        %v288 = vsel %vm171, 0.0, %v287
        %v290 = vsel %vm179, %v167, 0
        %292 = vmatprep.subr.mxu0 0.0
        %293 = vmatpush1.msra.mxu0 %v285
        %294 = vmatprep.subr.mxu0 0.0
        %295 = vmatpush1.msra.mxu0 %v282
        %296 = vmatprep.subr.mxu0 0.0
        %297 = vmatpush1.msra.mxu0 %v288
        %298 = vmatprep.subr.mxu0 0.0
        %299 = vmatpush1.msra.mxu0 0.0
        %300 = vmatprep.subr.mxu0 0.0
        %301 = vmatpush1.msra.mxu0 0.0
        %302 = vmatprep.subr.mxu0 0.0
        %303 = vmatpush1.msra.mxu0 0.0
        %304 = vmatprep.subr.mxu0 0.0
        %305 = vmatpush1.msra.mxu0 0.0
        %306 = vmatprep.subr.mxu0 0.0
        %307 = vmatpush1.msra.mxu0 0.0
        %308 = vmatprep.subr.mxu0 0.0
        %309 = vmatpush1.msra.mxu0 0.0
        %310 = vmatprep.subr.mxu0 0.0
        %311 = vmatpush1.msra.mxu0 0.0
        %312 = vmatprep.subr.mxu0 0.0
        %313 = vmatpush1.msra.mxu0 0.0
        %314 = vmatprep.subr.mxu0 0.0
        %315 = vmatpush1.msra.mxu0 0.0
        %316 = vmatprep.subr.mxu0 0.0
        %317 = vmatpush1.msra.mxu0 0.0
        %318 = vmatprep.subr.mxu0 0.0
        %319 = vmatpush1.msra.mxu0 0.0
        %320 = vmatprep.subr.mxu0 0.0
        %321 = vmatpush1.msra.mxu0 0.0
        %322 = vmatprep.subr.mxu0 0.0
        %323 = vmatpush1.msra.mxu0 0.0
        %324 = vmatprep.subr.mxu0 0.0
        %325 = vmatpush1.msra.mxu0 0.0
        %326 = vmatprep.subr.mxu0 0.0
        %327 = vmatpush1.msra.mxu0 0.0
        %328 = vmatprep.subr.mxu0 0.0
        %329 = vmatpush1.msra.mxu0 0.0
        %330 = vmatprep.subr.mxu0 0.0
        %331 = vmatpush1.msra.mxu0 0.0
        %332 = vmatprep.subr.mxu0 0.0
        %333 = vmatpush1.msra.mxu0 0.0
        %334 = vmatprep.subr.mxu0 0.0
        %335 = vmatpush1.msra.mxu0 0.0
        %336 = vmatprep.subr.mxu0 0.0
        %337 = vmatpush1.msra.mxu0 0.0
        %338 = vmatprep.subr.mxu0 0.0
        %339 = vmatpush1.msra.mxu0 0.0
        %340 = vmatprep.subr.mxu0 0.0
        %341 = vmatpush1.msra.mxu0 0.0
        %342 = vmatprep.subr.mxu0 0.0
        %343 = vmatpush1.msra.mxu0 0.0
        %344 = vmatprep.subr.mxu0 0.0
        %345 = vmatpush1.msra.mxu0 0.0
        %346 = vmatprep.subr.mxu0 0.0
        %347 = vmatpush1.msra.mxu0 0.0
        %348 = vmatprep.subr.mxu0 0.0
        %349 = vmatpush1.msra.mxu0 0.0
        %350 = vmatprep.subr.mxu0 0.0
        %351 = vmatpush1.msra.mxu0 0.0
        %352 = vmatprep.subr.mxu0 0.0
        %353 = vmatpush1.msra.mxu0 0.0
        %354 = vmatprep.subr.mxu0 0.0
        %355 = vmatpush1.msra.mxu0 0.0
        %356 = vmatprep.mubr.f32.mxu0 0.0
        %357 = vmatmul.mubr.f32.gmra.mrb[0].mxu0 %v290
        %v358 = vpop.f32.mrb[0].mxu0
        %v359 = vadd.f32 0.0, %v358
        %v360 = vpop.f32.mrb[0].mxu0
        %361 = vdwg.mxu0
        %362 = vadd.xlane.f32.xlu0 %v359
        %v363 = vpop.xlane.xlu0 %362
        %v364 = vrot.slane %v363, 4
        %v365 = vadd.f32 %v363, %v364
        %v366 = vrot.slane %v365, 2
        %v367 = vadd.f32 %v365, %v366
        %v368 = vrot.slane %v367, 1
        %v369 = vadd.f32 %v367, %v368
        %s370 = vtos %v369
        %s371 = smul.f32 %s370, 0.0009765625
        %v372 = vstv %s371
        %v373 = vsub.f32 %v359, %v372
        %v374 = vmul.f32 %v373, %v373
        %375 = vadd.xlane.f32.xlu0 %v374
        %v376 = vpop.xlane.xlu0 %375
        %v377 = vrot.slane %v376, 4
        %v378 = vadd.f32 %v376, %v377
        %v379 = vrot.slane %v378, 2
        %v380 = vadd.f32 %v378, %v379
        %v381 = vrot.slane %v380, 1
        %v382 = vadd.f32 %v380, %v381
        %s383 = vtos %v382
        %s384 = smul.f32 %s383, 0.0009765625
        %s385 = sadd.f32 %s384, 1e-05
        %v386 = vstv %s385
        %v387 = vrsqrt.pop %v386
        %s388 = vtos %v387
        %v389 = vstv %s388
        %v390 = vmul.f32 %v373, %v389
        %v391 = vmax.f32 %v390, 0.0
        %v392 = vadd.f32 %v391, %v172
        %v393 = vmax.f32 %v392, 0.0
        %394 = vst [vmem:[%s161] sm:$0xff] %v393
        %s395 = sand.u32 %s93, 1
        %s396 = scalar_lea.sflag [#allocation3], %s395
        %s397 = sand.u32 %s93, 1
        %s398 = smul.addr %s397, 8
        %s399 = scalar_lea.vmem [#allocation2], %s398
        // Predicated region
        $region33: #{basic_block.1} parent=31 // pred_check
          %p400 = pneg %p103
        $region34: #{basic_block.1} parent=31 // pred_check_branch
          %402 = sbr.rel (%p400) target = $region36
        $region35: #{basic_block.1} parent=31 // pred_region
          %s404 = ssub.s32 128, 128
          %405 = vsyncadd %s396, %s404
          %s406 = smul.addr %s17, 128
          %s407 = scalar_lea.hbm %s3, %s406
          %s409 = sshll.u32 %s399, 4
          %s410 = int_to_ptr.vmem [resolvable:$true] %s409
          %412 = dma.vmem_to_hbm [thread:$0]  %s410, 128, %s407, %s396
        $region36: #{basic_block.1} parent=31 // pred_fallthru
          _
      $region32: #{basic_block.1} parent=5 // pred_fallthru
        _
      %p413 = scmp.le.s32.totalorder 2, %s12
      // Predicated region
      $region37: #{basic_block.1} parent=5 // pred_check
        %p414 = pneg %p413
      $region38: #{basic_block.1} parent=5 // pred_check_branch
        %416 = sbr.rel (%p414) target = $region40
      $region39: #{basic_block.1} parent=5 // pred_region
        %s417 = ssub.s32 %s12, 2
        // Predicated region
        $region41: #{basic_block.1} parent=39 // pred_check
          %p418 = pneg %p109
        $region42: #{basic_block.1} parent=39 // pred_check_branch
          %420 = sbr.rel (%p418) target = $region44
        $region43: #{basic_block.1} parent=39 // pred_region
          %s421 = sand.u32 %s94, 1
          %s422 = scalar_lea.sflag [#allocation3], %s421
          %s423 = sand.u32 %s94, 1
          %s424 = smul.addr %s423, 8
          %s425 = scalar_lea.vmem [#allocation2], %s424
          %426 = dma.done %s422, 128
        $region44: #{basic_block.1} parent=39 // pred_fallthru
          _
      $region40: #{basic_block.1} parent=5 // pred_fallthru
        _
    $region6: #{basic_block.1} parent=1 // loop_footer
      %s16 = sadd.s32 1, %s12
    $region7: #{basic_block.1} parent=1 // loop_footer_branch
      %11 = sbr.rel target = $region3
    $region8: #{basic_block.1} parent=1 // loop_exit
      _
    %427 = vsyncpa [#allocation3], 1
    %s428 = scalar_lea.sflag [#allocation3], 1
    %429 = vsyncpa %s428, 1

</llo_original>
